<compile_context>
chip_gen: v7x
topology: tpu7x:2x2x1
jax: 0.10.0
libtpu: 0.0.40
codegen_flags: <defaults>
</compile_context>

<pallas_src>
import functools

import jax
import jax.numpy as jnp
from jax import lax
from jax.experimental import pallas as pl
from jax.experimental.pallas import tpu as pltpu

_EPS = 1e-5


def _round_up(x, m):
    return ((x + m - 1) // m) * m


def _vmem_limit_bytes(te, din_p, dout_p, seg_pad):
    """Footprint-based scoped-VMEM budget (double-buffered inputs, resident
    accumulators, in-kernel temporaries), capped under the v7x 64 MiB/TC."""
    footprint = (
        2 * te * din_p * 2            # h block (bf16), double-buffered
        + 2 * 2 * te * 128 * 4        # heads/rels blocks (lane-padded), x2 bufs
        + 2 * din_p * dout_p * 2      # folded weight (bf16), x2 bufs
        + 2 * 8 * dout_p * 4          # folded bias
        + 2 * seg_pad * dout_p * 4    # combined segment accumulator
        + te * seg_pad * 2            # one-hot temporary (bf16)
        + 4 * te * dout_p * 4         # caug / temp1 / aug temporaries (f32)
        + 2 * din_p * din_p * 4       # Gram accumulator (stats pass)
    )
    return int(min(max(2 * footprint, 16 * 1024 * 1024), 40 * 1024 * 1024))


# --------------------------------------------------------------------------
# Kernel 1: edge statistics — per-shard sum(h) and Gram matrix h^T h.
# Padded edge rows of h are exact zeros, so they contribute nothing.
# --------------------------------------------------------------------------
def _stats_kernel(h_ref, hsum_ref, gram_ref):
    i = pl.program_id(1)                     # E-block index within the shard

    @pl.when(i == 0)
    def _():
        hsum_ref[...] = jnp.zeros_like(hsum_ref)
        gram_ref[...] = jnp.zeros_like(gram_ref)

    hb = h_ref[...]                          # (te, din_p) bf16
    hf = hb.astype(jnp.float32)
    # Row 0 of the (8, din_p) accumulator carries the feature sums.
    hsum_ref[0:1, :] += jnp.sum(hf, axis=0, keepdims=True)
    # Gram matrix via bf16 MXU contraction with f32 accumulation.
    gram_ref[...] += lax.dot_general(hb, hb, (((0,), (0,)), ((), ())),
                                     preferred_element_type=jnp.float32)


# --------------------------------------------------------------------------
# Kernel 2: main pass — folded (bn0 -> a -> bn1 -> a_2) matmul, attention
# weights, and the combined entity/relation segment aggregation.
# The output accumulator is VMEM-resident across the reduction ("arbitrary")
# grid axis; one partial accumulator per shard ("parallel" axis).
# --------------------------------------------------------------------------
def _main_kernel(heads_ref, rels_ref, h_ref, w_ref, b_ref, out_ref, *,
                 blocks_per_shard, n_edges, out_dim, n_ent):
    s = pl.program_id(0)                     # shard ("parallel")
    i = pl.program_id(1)                     # E-block within shard ("arbitrary")
    te = h_ref.shape[0]
    seg_pad = out_ref.shape[0]

    @pl.when(i == 0)
    def _():
        out_ref[...] = jnp.zeros_like(out_ref)

    # Folded bn0 + linear a + bn1 (+ a_2 in lane `out_dim`):
    #   caug[:, :out_dim] = c,   caug[:, out_dim] = z = a_2(c) + b_a2.
    # TODO(synk): nn.Dropout(0.5) after bn0 omitted (stochastic) -> identity.
    caug = jnp.dot(h_ref[...], w_ref[...],
                   preferred_element_type=jnp.float32) + b_ref[...]   # (te, dout_p)

    lane = lax.broadcasted_iota(jnp.int32, caug.shape, 1)
    # Extract the z lane with a masked row-reduction (lane select + XLU sum).
    z = jnp.sum(jnp.where(lane == out_dim, caug, 0.0), axis=-1, keepdims=True)
    bneg = -jnp.where(z > 0, z, 0.01 * z)                             # -leaky_relu

    # Validity mask for padded edge rows (zero their contribution everywhere).
    row = (s * blocks_per_shard + i) * te + lax.broadcasted_iota(
        jnp.int32, (te, 1), 0)
    valid = (row < n_edges).astype(jnp.float32)                       # (te, 1)
    e_b = jnp.exp(bneg) * valid                                       # (te, 1)

    temp1 = e_b * caug                                                # (te, dout_p)
    # Aux lanes: lane out_dim = e_b (entity softmax denominator),
    #            lane out_dim+1 = valid (relation count).
    aug = jnp.where(lane == out_dim, e_b, temp1)
    aug = jnp.where(lane == out_dim + 1, valid, aug)
    aug_bf = aug.astype(jnp.bfloat16)

    # Combined one-hot over [entities ++ relations] (two ones per edge row).
    # Padded rows hit columns 0 / n_ent, but their aug row is all-zero.
    col = lax.broadcasted_iota(jnp.int32, (te, seg_pad), 1)
    hit = jnp.logical_or(col == heads_ref[...], col == rels_ref[...] + n_ent)
    oh = jnp.where(hit, 1.0, 0.0).astype(jnp.bfloat16)

    # Single bf16 MXU contraction with f32 accumulation: both segment sums,
    # the e_b denominators and the relation counts in one pass.
    out_ref[...] += lax.dot_general(oh, aug_bf, (((0,), (0,)), ((), ())),
                                    preferred_element_type=jnp.float32)


# --------------------------------------------------------------------------
# Wrapper
# --------------------------------------------------------------------------
def _max_norm_lookup(table, ids, max_norm=1.0):
    # nn.Embedding(max_norm=1, norm_type=2) renormalization at lookup time.
    rows = table[ids]
    norms = jnp.sqrt(jnp.sum(rows * rows, axis=1, keepdims=True))
    scale = jnp.where(norms > max_norm, max_norm / (norms + 1e-7), 1.0)
    return rows * scale


def kglayer_forward(triplets, params, n_entities, n_relations, out_dim,
                    *, block_e=512, num_shards=2, eps=_EPS):
    """triplets: (E, 3) int32 with columns (head, relation, tail)."""
    heads = triplets[:, 0].astype(jnp.int32)
    rels = triplets[:, 1].astype(jnp.int32)
    tails = triplets[:, 2].astype(jnp.int32)

    # Embedding gather + concat (glue; gathers stay in plain JAX).
    h = jnp.concatenate(
        [_max_norm_lookup(params["ent_embed"], heads),
         _max_norm_lookup(params["rel_embed"], rels),
         _max_norm_lookup(params["ent_embed"], tails)], axis=1).astype(jnp.float32)

    E, din = h.shape
    din_p = _round_up(din, 128)                    # lane-pad 3*in_dim
    dout_p = _round_up(out_dim + 2, 128)           # out_dim + [z | e_b | count] lanes
    seg = n_entities + n_relations                 # combined segment axis
    seg_pad = _round_up(seg, 128)

    te = max(8, min(block_e, _round_up(E, 8)))
    te = _round_up(te, 8)
    e_pad = _round_up(E, te * num_shards)
    n_blk = e_pad // (te * num_shards)             # E-blocks per shard

    # Zero-padded operands (pad rows/cols are exact zeros -> no effect).
    # h stored bf16 in HBM: native MXU dtype + half the DMA bytes.
    h_p = jnp.zeros((e_pad, din_p), jnp.bfloat16).at[:E, :din].set(
        h.astype(jnp.bfloat16))
    heads_p = jnp.zeros((e_pad, 1), jnp.int32).at[:E, 0].set(heads)
    rels_p = jnp.zeros((e_pad, 1), jnp.int32).at[:E, 0].set(rels)

    vmem_limit = _vmem_limit_bytes(te, din_p, dout_p, seg_pad)
    cparams = pltpu.CompilerParams(
        dimension_semantics=("parallel", "arbitrary"),   # shards x E-blocks
        vmem_limit_bytes=vmem_limit,
    )

    def edge_map(s, i):
        return (s * n_blk + i, 0)

    h_spec = pl.BlockSpec((te, din_p), edge_map)
    idx_spec = pl.BlockSpec((te, 1), edge_map)

    # ---- pass 1: per-shard sum(h) and Gram matrix h^T h ----
    hsum_parts, gram_parts = pl.pallas_call(
        _stats_kernel,
        grid=(num_shards, n_blk),
        in_specs=[h_spec],
        out_specs=(pl.BlockSpec((8, din_p), lambda s, i: (s, 0)),
                   pl.BlockSpec((din_p, din_p), lambda s, i: (s, 0))),
        out_shape=(jax.ShapeDtypeStruct((num_shards * 8, din_p), jnp.float32),
                   jax.ShapeDtypeStruct((num_shards * din_p, din_p), jnp.float32)),
        compiler_params=cparams,
    )(h_p)

    # ---- fold bn0 / bn1 / a_2 into one (din, out_dim+1) affine (tiny XLA) ----
    hsum = hsum_parts.reshape(num_shards, 8, din_p).sum(axis=(0, 1))[:din]
    gram = gram_parts.reshape(num_shards, din_p, din_p).sum(axis=0)[:din, :din]

    g0 = params["bn0_gamma"].reshape(-1)[:din]
    g1 = params["bn1_gamma"].reshape(-1)[:out_dim]
    beta1 = params["bn1_beta"].reshape(-1)[:out_dim]
    w_a = params["w_a"]                               # (din, out_dim)
    w_a2 = params["w_a2"][:, 0]                       # (out_dim,)
    b_a2 = params["b_a2"].reshape(())

    inv_e = 1.0 / float(E)
    mean0 = hsum * inv_e
    var0 = jnp.maximum(jnp.diagonal(gram) * inv_e - mean0 * mean0, 0.0)
    s0g0 = lax.rsqrt(var0 + eps) * g0                 # bn0 scale (bias cancels)
    w1 = w_a * s0g0[:, None]                          # diag(s0g0) @ W_a
    cov = gram * inv_e - jnp.outer(mean0, mean0)      # biased Cov(h)
    var1 = jnp.maximum(jnp.sum(w1 * (cov @ w1), axis=0), 0.0)   # Var(pre) analytic
    s1g1 = lax.rsqrt(var1 + eps) * g1
    w_fold = w1 * s1g1[None, :]
    b_fold = beta1 - (mean0 @ w1) * s1g1              # b0 / b_a cancel through mean1
    wz = w_fold @ w_a2                                # a_2 folded into extra lane
    bz = jnp.dot(b_fold, w_a2) + b_a2

    w_aug = jnp.zeros((din_p, dout_p), jnp.float32)
    w_aug = w_aug.at[:din, :out_dim].set(w_fold).at[:din, out_dim].set(wz)
    w_aug_bf = w_aug.astype(jnp.bfloat16)
    b_aug = jnp.zeros((1, dout_p), jnp.float32)
    b_aug = b_aug.at[0, :out_dim].set(b_fold).at[0, out_dim].set(bz)

    # ---- pass 2: folded matmul + attention + combined segment aggregation ----
    # NOTE: for very large n_entities the (seg_pad, dout_p) resident
    # accumulator should be tiled by an extra segment grid axis (one-hot built
    # only against the current entity tile) or replaced by pre-sorted
    # contiguous segment reductions; the one-hot cost is O(E * seg_pad).
    # If the h DMA is still exposed at large E, add
    # pipeline_mode=pl.Buffered(3) to h_spec.
    out_parts = pl.pallas_call(
        functools.partial(_main_kernel, blocks_per_shard=n_blk, n_edges=E,
                          out_dim=out_dim, n_ent=n_entities),
        grid=(num_shards, n_blk),
        in_specs=[idx_spec, idx_spec, h_spec,
                  pl.BlockSpec((din_p, dout_p), lambda s, i: (0, 0)),
                  pl.BlockSpec((1, dout_p), lambda s, i: (0, 0))],
        out_specs=pl.BlockSpec((seg_pad, dout_p), lambda s, i: (s, 0)),
        out_shape=jax.ShapeDtypeStruct((num_shards * seg_pad, dout_p),
                                       jnp.float32),
        compiler_params=cparams,
    )(heads_p, rels_p, h_p, w_aug_bf, b_aug)

    # ---- epilogue in plain XLA: sum shard partials, exact normalisation ----
    acc = out_parts.reshape(num_shards, seg_pad, dout_p).sum(axis=0)
    ent = acc[:n_entities]
    rel = acc[n_entities:n_entities + n_relations]

    ebs = ent[:, out_dim:out_dim + 1]
    ebs = jnp.where(ebs == 0.0, 1e-12, ebs)
    h_ent = ent[:, :out_dim] / ebs

    cnt = jnp.maximum(rel[:, out_dim + 1:out_dim + 2], 1.0)
    h_rel = rel[:, :out_dim] / cnt
    return h_ent, h_rel


# --------------------------------------------------------------------------
# Pure-JAX reference (f32) for a sanity check.
# --------------------------------------------------------------------------
def kglayer_reference(triplets, params, n_entities, n_relations, eps=_EPS):
    heads = triplets[:, 0].astype(jnp.int32)
    rels = triplets[:, 1].astype(jnp.int32)
    tails = triplets[:, 2].astype(jnp.int32)
    h = jnp.concatenate(
        [_max_norm_lookup(params["ent_embed"], heads),
         _max_norm_lookup(params["rel_embed"], rels),
         _max_norm_lookup(params["ent_embed"], tails)], axis=1).astype(jnp.float32)

    mean0 = jnp.mean(h, axis=0, keepdims=True)
    var0 = jnp.mean((h - mean0) ** 2, axis=0, keepdims=True)
    hn = (h - mean0) / jnp.sqrt(var0 + eps) * params["bn0_gamma"] + params["bn0_beta"]
    pre = hn @ params["w_a"] + params["b_a"]
    mean1 = jnp.mean(pre, axis=0, keepdims=True)
    var1 = jnp.mean((pre - mean1) ** 2, axis=0, keepdims=True)
    c = (pre - mean1) / jnp.sqrt(var1 + eps) * params["bn1_gamma"] + params["bn1_beta"]
    z = c @ params["w_a2"] + params["b_a2"]
    b = -jnp.where(z > 0, z, 0.01 * z)
    e_b = jnp.exp(b)
    temp1 = e_b * c
    ebs = jax.ops.segment_sum(e_b, heads, n_entities)
    hs = jax.ops.segment_sum(temp1, heads, n_entities)
    ebs = jnp.where(ebs == 0.0, 1e-12, ebs)
    h_ent = hs / ebs
    rel_sum = jax.ops.segment_sum(temp1, rels, n_relations)
    rel_cnt = jax.ops.segment_sum(jnp.ones((h.shape[0], 1), jnp.float32),
                                  rels, n_relations)
    h_rel = rel_sum / jnp.maximum(rel_cnt, 1.0)
    return h_ent, h_rel


def init_params(key, n_entities, n_relations, in_dim, out_dim,
                margin=6.0, epsilon=2.0):
    ks = jax.random.split(key, 6)
    embed_range = (margin + epsilon) / out_dim

    fan_in_a, fan_out_a = 3 * in_dim, out_dim
    std_a = 1.414 * (2.0 / (fan_in_a + fan_out_a)) ** 0.5
    w_a = std_a * jax.random.normal(ks[0], (3 * in_dim, out_dim), jnp.float32)
    b_a = jax.random.uniform(ks[1], (1, out_dim), jnp.float32,
                             -1.0 / (fan_in_a ** 0.5), 1.0 / (fan_in_a ** 0.5))

    std_a2 = 1.414 * (2.0 / (out_dim + 1)) ** 0.5
    w_a2 = std_a2 * jax.random.normal(ks[2], (out_dim, 1), jnp.float32)
    b_a2 = jax.random.uniform(ks[3], (1, 1), jnp.float32,
                              -1.0 / (out_dim ** 0.5), 1.0 / (out_dim ** 0.5))

    ent_embed = jax.random.uniform(ks[4], (n_entities, in_dim), jnp.float32,
                                   -embed_range, embed_range)
    rel_embed = jax.random.uniform(ks[5], (n_relations, in_dim), jnp.float32,
                                   -embed_range, embed_range)

    return dict(
        w_a=w_a, b_a=b_a, w_a2=w_a2, b_a2=b_a2,
        ent_embed=ent_embed, rel_embed=rel_embed,
        bn0_gamma=jnp.ones((1, 3 * in_dim), jnp.float32),
        bn0_beta=jnp.zeros((1, 3 * in_dim), jnp.float32),
        bn1_gamma=jnp.ones((1, out_dim), jnp.float32),
        bn1_beta=jnp.zeros((1, out_dim), jnp.float32),
    )


if __name__ == "__main__":
    n_entities, n_relations = 32, 8
    in_dim, out_dim = 16, 32
    E = 500   # not a multiple of the E-block -> exercises the validity mask

    key = jax.random.PRNGKey(0)
    kp, kh, kr, kt = jax.random.split(key, 4)
    params = init_params(kp, n_entities, n_relations, in_dim, out_dim)

    heads = jax.random.randint(kh, (E,), 0, n_entities, jnp.int32)
    rels = jax.random.randint(kr, (E,), 0, n_relations, jnp.int32)
    rels = rels.at[0].set(n_relations - 1)   # ensure rel.max()+1 == n_relations
    tails = jax.random.randint(kt, (E,), 0, n_entities, jnp.int32)
    triplets = jnp.stack([heads, rels, tails], axis=1)          # (E, 3)

    # block_e=128 with 2 shards -> grid (2, 2): exercises sharding + masking.
    # Production default block_e=512 amortises per-grid-step overhead.
    h_ent, h_rel = kglayer_forward(triplets, params, n_entities, n_relations,
                                   out_dim, block_e=128, num_shards=2)
    jax.block_until_ready((h_ent, h_rel))

    assert h_ent.shape == (n_entities, out_dim)
    assert h_rel.shape == (n_relations, out_dim)
    assert bool(jnp.all(jnp.isfinite(h_ent))) and bool(jnp.all(jnp.isfinite(h_rel)))

    # Sanity check vs pure-JAX f32 reference. bf16 MXU matmuls + bf16 one-hot
    # aggregation trade ~1e-2 absolute error for much higher MXU throughput
    # (per the perf review), so the absolute tolerance is loose.
    ref_ent, ref_rel = kglayer_reference(triplets, params, n_entities, n_relations)
    err = max(float(jnp.max(jnp.abs(h_ent - ref_ent))),
              float(jnp.max(jnp.abs(h_rel - ref_rel))))
    assert err < 0.15, f"max abs err vs reference: {err}"

    print("KERNEL_OK")
</pallas_src>

<mosaic_0001>
module attributes {stable_mosaic.version = 11 : i64} {
  func.func @_stats_kernel(%arg0: i32, %arg1: i32, %arg2: memref<128x128xbf16, #tpu.memory_space<vmem>>, %arg3: memref<8x128xf32, #tpu.memory_space<vmem>>, %arg4: memref<128x128xf32, #tpu.memory_space<vmem>>) attributes {dimension_semantics = [#tpu.dimension_semantics<parallel>, #tpu.dimension_semantics<arbitrary>], iteration_bounds = array<i64: 2, 2>, scalar_prefetch = 0 : i64, scratch_operands = 0 : i64, tpu.core_type = #tpu.core_type<tc>, window_params = [{transform_indices = @transform_0, window_bounds = array<i64: 128, 128>}, {transform_indices = @transform_1, window_bounds = array<i64: 8, 128>}, {transform_indices = @transform_2, window_bounds = array<i64: 128, 128>}]} {
    %c0_i32 = arith.constant 0 : i32
    %0 = arith.cmpi eq, %arg1, %c0_i32 : i32
    %1 = arith.extui %0 : i1 to i32
    %c0_i32_0 = arith.constant 0 : i32
    %2 = arith.cmpi ne, %1, %c0_i32_0 : i32
    scf.if %2 {
      %cst_11 = arith.constant 0.000000e+00 : f32
      %14 = vector.broadcast %cst_11 : f32 to vector<8x128xf32>
      %c0_12 = arith.constant 0 : index
      %c0_13 = arith.constant 0 : index
      %15 = vector.load %arg3[%c0_12, %c0_13] : memref<8x128xf32, #tpu.memory_space<vmem>>, vector<8x128xf32>
      tpu.vector_store %arg3[%c0_12, %c0_13], %14 {strides = array<i32>} : memref<8x128xf32, #tpu.memory_space<vmem>>, vector<8x128xf32>,
      %cst_14 = arith.constant 0.000000e+00 : f32
      %16 = vector.broadcast %cst_14 : f32 to vector<128x128xf32>
      %c0_15 = arith.constant 0 : index
      %c0_16 = arith.constant 0 : index
      %17 = vector.load %arg4[%c0_15, %c0_16] : memref<128x128xf32, #tpu.memory_space<vmem>>, vector<128x128xf32>
      tpu.vector_store %arg4[%c0_15, %c0_16], %16 {strides = array<i32>} : memref<128x128xf32, #tpu.memory_space<vmem>>, vector<128x128xf32>,
    } else {
    }
    %c0 = arith.constant 0 : index
    %c0_1 = arith.constant 0 : index
    %3 = vector.load %arg2[%c0, %c0_1] : memref<128x128xbf16, #tpu.memory_space<vmem>>, vector<128x128xbf16>
    %4 = arith.extf %3 : vector<128x128xbf16> to vector<128x128xf32>
    %c0_2 = arith.constant 0 : index
    %c0_3 = arith.constant 0 : index
    %5 = vector.load %arg3[%c0_2, %c0_3] : memref<8x128xf32, #tpu.memory_space<vmem>>, vector<1x128xf32>
    %cst = arith.constant dense<0.000000e+00> : vector<128xf32>
    %6 = vector.multi_reduction <add>, %4, %cst [0] : vector<128x128xf32> to vector<128xf32>
    %7 = vector.shape_cast %6 : vector<128xf32> to vector<1x128xf32>
    %8 = arith.addf %5, %7 : vector<1x128xf32>
    %c0_4 = arith.constant 0 : index
    %c0_5 = arith.constant 0 : index
    %9 = vector.load %arg3[%c0_4, %c0_5] : memref<8x128xf32, #tpu.memory_space<vmem>>, vector<1x128xf32>
    tpu.vector_store %arg3[%c0_4, %c0_5], %8 {strides = array<i32>} : memref<8x128xf32, #tpu.memory_space<vmem>>, vector<1x128xf32>,
    %c0_6 = arith.constant 0 : index
    %c0_7 = arith.constant 0 : index
    %10 = vector.load %arg4[%c0_6, %c0_7] : memref<128x128xf32, #tpu.memory_space<vmem>>, vector<128x128xf32>
    %cst_8 = arith.constant dense<0.000000e+00> : vector<128x128xf32>
    %11 = tpu.matmul %3, %3, %cst_8 {dimension_numbers = #tpu.dot_dimension_numbers<[0], [0], [1], [1], [0, 1, 1, 1], [], []>} : vector<128x128xbf16>, vector<128x128xbf16>, vector<128x128xf32> -> vector<128x128xf32>
    %12 = arith.addf %10, %11 : vector<128x128xf32>
    %c0_9 = arith.constant 0 : index
    %c0_10 = arith.constant 0 : index
    %13 = vector.load %arg4[%c0_9, %c0_10] : memref<128x128xf32, #tpu.memory_space<vmem>>, vector<128x128xf32>
    tpu.vector_store %arg4[%c0_9, %c0_10], %12 {strides = array<i32>} : memref<128x128xf32, #tpu.memory_space<vmem>>, vector<128x128xf32>,
    return
  }
  func.func @transform_0(%arg0: i32, %arg1: i32) -> (i32, i32) {
    %c2_i32 = arith.constant 2 : i32
    %0 = arith.muli %arg0, %c2_i32 : i32
    %1 = arith.addi %0, %arg1 : i32
    %c0_i32 = arith.constant 0 : i32
    %c0_i32_0 = arith.constant 0 : i32
    return %1, %c0_i32 : i32, i32
  }
  func.func @transform_1(%arg0: i32, %arg1: i32) -> (i32, i32) {
    %c0_i32 = arith.constant 0 : i32
    %c0_i32_0 = arith.constant 0 : i32
    return %arg0, %c0_i32 : i32, i32
  }
  func.func @transform_2(%arg0: i32, %arg1: i32) -> (i32, i32) {
    %c0_i32 = arith.constant 0 : i32
    %c0_i32_0 = arith.constant 0 : i32
    return %arg0, %c0_i32 : i32, i32
  }
}

</mosaic_0001>

<llo_original>
// kernel: tpu_custom_call.1
$region0: #{tpu_custom_call.1}
  #allocation0 [shape = 'u32[]', space=smem, size = 0x4, offset = 0x4, fixed_abs, tag = 'smem constant byte address 0x4 - core index']
  #allocation1 [shape = 'u32[144,128]{1,0:T(1,128)}', space=vmem, size = 0x12000, scoped, tag = 'internal scratch']
  %s0 = inlined_call_operand.hbm [shape: bf16[512,128], index: 0, kind: input, shape index: {}]
  %s1 = inlined_call_operand.hbm [shape: f32[16,128], index: 1, kind: output, shape index: {0}]
  %s2 = inlined_call_operand.hbm [shape: f32[256,128], index: 2, kind: output, shape index: {1}]
  %3 = xla_tuple %s1, %s2
  %s4 = sld [smem:[#allocation0]]
  $region53: #{tpu_custom_call.1} parent=0
    _
  %s6 = ssub.s32 1, %s4
  %s7 = scalar_select 0, %s6, %s4
  $region1: #{tpu_custom_call.1} parent=0
    #allocation2 [shape = 'u8[65536]{0}', space=vmem, size = 0x10000, scoped, tag = 'input window, operand 0']
    #allocation3 [shape = 's32[2]{0}', space=sflag, size = 0x8, scoped, tag = 'scoped memory for tpu_custom_call.1']
    #allocation4 [shape = 's32[2]{0}', space=sflag, size = 0x8, scoped, tag = 'scoped memory for tpu_custom_call.1']
    #allocation5 [shape = 'u8[8192]{0}', space=vmem, size = 0x2000, scoped, tag = 'output window, operand 0']
    #allocation6 [shape = 'u8[131072]{0}', space=vmem, size = 0x20000, scoped, tag = 'output window, operand 1']
    #allocation7 [shape = 's32[2]{0}', space=sflag, size = 0x8, scoped, tag = 'scoped memory for tpu_custom_call.1']
    %8 = vsyncpa [#allocation3], 0
    %s9 = scalar_lea.sflag [#allocation3], 1
    %10 = vsyncpa %s9, 0
    %11 = vsyncpa [#allocation4], 0
    %s12 = scalar_lea.sflag [#allocation4], 1
    %13 = vsyncpa %s12, 0
    %14 = vsyncpa [#allocation7], 0
    %s15 = scalar_lea.sflag [#allocation7], 1
    %16 = vsyncpa %s15, 0
    loop: start=0, step=1, limit=6
    $region2: #{tpu_custom_call.1} parent=1 // loop_pre_header
      _
    $region3: #{tpu_custom_call.1} parent=1 // loop_header
      %s18 = sphi 0, %s22
      %p19 = scmp.ge.s32.totalorder %s18, 6
      %s25 = sphi 0, %s37
      %s26 = sphi 0, %s33
      %s27 = sphi 0, %s25
      %s28 = sphi 0, %s26
      %s29 = sphi 0, %s27
      %s30 = sphi 0, %s28
      %s44 = sphi 0, %s46
      %s47 = sphi 0, %s44
      %s48 = sphi 0, %s47
      %s64 = sphi 0, %s48
      %s70 = sphi 0, %s72
      %s73 = sphi 0, %s70
      %s74 = sphi 0, %s73
      %s90 = sphi 0, %s74
      %s96 = sphi 0, %s98
      %s99 = sphi 0, %s96
      %s100 = sphi 0, %s99
      %s116 = sphi 0, %s100
    $region4: #{tpu_custom_call.1} parent=1 // loop_header_branch
      %21 = sbr.rel (%p19) target = $region8
    $region5: #{tpu_custom_call.1} parent=1 // loop_body
      %s23 = ssub.s32 %s18, 1
      %s24 = ssub.s32 %s18, 2
      %s31 = sadd.s32 1, %s26
      %p32 = scmp.ge.s32.totalorder %s31, 2
      %s33 = scalar_select %p32, 0, %s31
      %s34 = sadd.s32 1, %s25
      %s35 = scalar_select %p32, %s34, %s25
      %p36 = scmp.ge.s32.totalorder %s35, 2
      %s37 = scalar_select %p36, 0, %s35
      %s38 = smul.u32 %s25, 2
      %s39 = sadd.s32 %s38, %s26
      %s40 = smul.u32 %s37, 2
      %s41 = sadd.s32 %s40, %s33
      %s42 = ssub.s32 %s39, %s41
      %p43 = scmp.eq.s32.totalorder %s42, 0
      %s45 = sadd.s32 %s44, 1
      %s46 = scalar_select %p43, %s44, %s45
      %p49 = pneg %p43
      %p50 = scmp.eq.s32.totalorder %s18, 3
      %p51 = por %p49, %p50
      %p52 = scmp.ne.s32.totalorder %s44, %s47
      %p53 = scmp.eq.s32.totalorder %s18, 0
      %p54 = por %p52, %p53
      %p55 = scmp.ne.s32.totalorder %s44, %s47
      %p56 = scmp.eq.s32.totalorder %s23, 3
      %p57 = por %p55, %p56
      %p58 = scmp.ne.s32.totalorder %s47, %s48
      %p59 = scmp.eq.s32.totalorder %s23, 0
      %p60 = por %p58, %p59
      %p61 = scmp.ne.s32.totalorder %s47, %s48
      %p62 = scmp.eq.s32.totalorder %s24, 3
      %p63 = por %p61, %p62
      %p65 = scmp.ne.s32.totalorder %s48, %s64
      %p66 = scmp.eq.s32.totalorder %s24, 0
      %p67 = por %p65, %p66
      %s68 = ssub.s32 %s25, %s37
      %p69 = scmp.eq.s32.totalorder %s68, 0
      %s71 = sadd.s32 %s70, 1
      %s72 = scalar_select %p69, %s70, %s71
      %p75 = pneg %p69
      %p76 = scmp.eq.s32.totalorder %s18, 3
      %p77 = por %p75, %p76
      %p78 = scmp.ne.s32.totalorder %s70, %s73
      %p79 = scmp.eq.s32.totalorder %s18, 0
      %p80 = por %p78, %p79
      %p81 = scmp.ne.s32.totalorder %s70, %s73
      %p82 = scmp.eq.s32.totalorder %s23, 3
      %p83 = por %p81, %p82
      %p84 = scmp.ne.s32.totalorder %s73, %s74
      %p85 = scmp.eq.s32.totalorder %s23, 0
      %p86 = por %p84, %p85
      %p87 = scmp.ne.s32.totalorder %s73, %s74
      %p88 = scmp.eq.s32.totalorder %s24, 3
      %p89 = por %p87, %p88
      %p91 = scmp.ne.s32.totalorder %s74, %s90
      %p92 = scmp.eq.s32.totalorder %s24, 0
      %p93 = por %p91, %p92
      %s94 = ssub.s32 %s25, %s37
      %p95 = scmp.eq.s32.totalorder %s94, 0
      %s97 = sadd.s32 %s96, 1
      %s98 = scalar_select %p95, %s96, %s97
      %p101 = pneg %p95
      %p102 = scmp.eq.s32.totalorder %s18, 3
      %p103 = por %p101, %p102
      %p104 = scmp.ne.s32.totalorder %s96, %s99
      %p105 = scmp.eq.s32.totalorder %s18, 0
      %p106 = por %p104, %p105
      %p107 = scmp.ne.s32.totalorder %s96, %s99
      %p108 = scmp.eq.s32.totalorder %s23, 3
      %p109 = por %p107, %p108
      %p110 = scmp.ne.s32.totalorder %s99, %s100
      %p111 = scmp.eq.s32.totalorder %s23, 0
      %p112 = por %p110, %p111
      %p113 = scmp.ne.s32.totalorder %s99, %s100
      %p114 = scmp.eq.s32.totalorder %s24, 3
      %p115 = por %p113, %p114
      %p117 = scmp.ne.s32.totalorder %s100, %s116
      %p118 = scmp.eq.s32.totalorder %s24, 0
      %p119 = por %p117, %p118
      %p120 = scmp.le.s32.totalorder 1, %s18
      %p121 = scmp.lt.s32.totalorder %s18, 5
      %p122 = pnand %p120, %p121
      %p123 = pneg %p122
      // Predicated region
      $region9: #{tpu_custom_call.1} parent=5 // pred_check
        _
      $region10: #{tpu_custom_call.1} parent=5 // pred_check_branch
        %125 = sbr.rel (%p122) target = $region12
      $region11: #{tpu_custom_call.1} parent=5 // pred_region
        %s126 = ssub.s32 %s18, 1
      $region12: #{tpu_custom_call.1} parent=5 // pred_fallthru
        _
      %p127 = scmp.lt.s32.totalorder %s18, 4
      // Predicated region
      $region13: #{tpu_custom_call.1} parent=5 // pred_check
        %p128 = pneg %p127
      $region14: #{tpu_custom_call.1} parent=5 // pred_check_branch
        %130 = sbr.rel (%p128) target = $region16
      $region15: #{tpu_custom_call.1} parent=5 // pred_region
        // Predicated region
        $region17: #{tpu_custom_call.1} parent=15 // pred_check
          %p131 = pneg %p54
        $region18: #{tpu_custom_call.1} parent=15 // pred_check_branch
          %133 = sbr.rel (%p131) target = $region20
        $region19: #{tpu_custom_call.1} parent=15 // pred_region
          %s134 = sand.u32 %s44, 1
          %s135 = scalar_lea.sflag [#allocation3], %s134
          %s136 = sand.u32 %s44, 1
          %s137 = smul.addr %s136, 64
          %s138 = scalar_lea.vmem [#allocation2], %s137
          %s139 = smul.u32 %s25, 2
          %s140 = sadd.s32 %s139, %s26
          %s141 = smul.u32 16, %s140
          %s143 = ssub.s32 1024, 1024
          %144 = vsyncadd %s135, %s143
          %s145 = smul.addr %s141, 64
          %s146 = scalar_lea.hbm %s0, %s145
          %s147 = sshll.u32 %s138, 4
          %s148 = int_to_ptr.vmem [resolvable:$true] %s147
          %153 = dma.hbm_to_vmem [thread:$0]  %s146, 1024, %s148, %s135, 64, 64, 4
        $region20: #{tpu_custom_call.1} parent=15 // pred_fallthru
          _
      $region16: #{tpu_custom_call.1} parent=5 // pred_fallthru
        _
      %p154 = scmp.le.s32.totalorder 1, %s18
      %p155 = scmp.lt.s32.totalorder %s18, 5
      %p156 = pnand %p154, %p155
      %p157 = pneg %p156
      // Predicated region
      $region21: #{tpu_custom_call.1} parent=5 // pred_check
        _
      $region22: #{tpu_custom_call.1} parent=5 // pred_check_branch
        %159 = sbr.rel (%p156) target = $region24
      $region23: #{tpu_custom_call.1} parent=5 // pred_region
        %s160 = ssub.s32 %s18, 1
        %s161 = sand.u32 %s47, 1
        %s162 = scalar_lea.sflag [#allocation3], %s161
        %s163 = sand.u32 %s47, 1
        %s164 = smul.addr %s163, 64
        %s165 = scalar_lea.vmem [#allocation2], %s164
        // Predicated region
        $region25: #{tpu_custom_call.1} parent=23 // pred_check
          %p166 = pneg %p60
        $region26: #{tpu_custom_call.1} parent=23 // pred_check_branch
          %168 = sbr.rel (%p166) target = $region28
        $region27: #{tpu_custom_call.1} parent=23 // pred_region
          %169 = dma.done %s162, 1024
        $region28: #{tpu_custom_call.1} parent=23 // pred_fallthru
          _
        %s170 = sand.u32 %s47, 1
        %s171 = scalar_lea.sflag [#allocation3], %s170
        %s172 = sand.u32 %s47, 1
        %s173 = smul.addr %s172, 64
        %s174 = scalar_lea.vmem [#allocation2], %s173
        %p175 = pneg %p60
        %p176 = pneg %p57
        %p177 = pneg %p86
        %p178 = pneg %p83
        %s179 = sand.u32 %s73, 1
        %s180 = scalar_lea.sflag [#allocation4], %s179
        %s181 = sand.u32 %s73, 1
        %s182 = smul.addr %s181, 8
        %s183 = scalar_lea.vmem [#allocation5], %s182
        %p184 = pneg %p112
        %p185 = pneg %p109
        %s186 = sand.u32 %s99, 1
        %s187 = scalar_lea.sflag [#allocation7], %s186
        %s188 = sand.u32 %s99, 1
        %s189 = smul.addr %s188, 128
        %s190 = scalar_lea.vmem [#allocation6], %s189
        %s191 = smul.u32 %s27, 2
        %s192 = sadd.s32 %s191, %s28
        %s193 = smul.u32 16, %s192
        %s194 = smul.u32 16, %s27
        %p196 = scmp.eq.s32.totalorder %s28, 0
        // Predicated region
        $region29: #{tpu_custom_call.1} parent=23 // pred_check
          %p197 = pneg %p196
        $region30: #{tpu_custom_call.1} parent=23 // pred_check_branch
          %199 = sbr.rel (%p197) target = $region32
        $region31: #{tpu_custom_call.1} parent=23 // pred_region
          %200 = vst [vmem:[%s183] sm:$0xff] 0.0
          %201 = vst [vmem:[%s190] sm:$0xff] 0.0
          %202 = vst [vmem:[%s190 + $0x8] sm:$0xff] 0.0
          %203 = vst [vmem:[%s190 + $0x10] sm:$0xff] 0.0
          %204 = vst [vmem:[%s190 + $0x18] sm:$0xff] 0.0
          %205 = vst [vmem:[%s190 + $0x20] sm:$0xff] 0.0
          %206 = vst [vmem:[%s190 + $0x28] sm:$0xff] 0.0
          %207 = vst [vmem:[%s190 + $0x30] sm:$0xff] 0.0
          %208 = vst [vmem:[%s190 + $0x38] sm:$0xff] 0.0
          %209 = vst [vmem:[%s190 + $0x40] sm:$0xff] 0.0
          %210 = vst [vmem:[%s190 + $0x48] sm:$0xff] 0.0
          %211 = vst [vmem:[%s190 + $0x50] sm:$0xff] 0.0
          %212 = vst [vmem:[%s190 + $0x58] sm:$0xff] 0.0
          %213 = vst [vmem:[%s190 + $0x60] sm:$0xff] 0.0
          %214 = vst [vmem:[%s190 + $0x68] sm:$0xff] 0.0
          %215 = vst [vmem:[%s190 + $0x70] sm:$0xff] 0.0
          %216 = vst [vmem:[%s190 + $0x78] sm:$0xff] 0.0
        $region32: #{tpu_custom_call.1} parent=23 // pred_fallthru
          _
        %v217 = vld [vmem:[%s165] sm:$0xf]
        %v218 = vld [vmem:[%s165 + $0x4] sm:$0xf]
        %v219 = vld [vmem:[%s165 + $0x8] sm:$0xf]
        %v220 = vld [vmem:[%s165 + $0xc] sm:$0xf]
        %v221 = vld [vmem:[%s165 + $0x10] sm:$0xf]
        %v222 = vld [vmem:[%s165 + $0x14] sm:$0xf]
        %v223 = vld [vmem:[%s165 + $0x18] sm:$0xf]
        %v224 = vld [vmem:[%s165 + $0x1c] sm:$0xf]
        %v225 = vld [vmem:[%s165 + $0x20] sm:$0xf]
        %v226 = vld [vmem:[%s165 + $0x24] sm:$0xf]
        %v227 = vld [vmem:[%s165 + $0x28] sm:$0xf]
        %v228 = vld [vmem:[%s165 + $0x2c] sm:$0xf]
        %v229 = vld [vmem:[%s165 + $0x30] sm:$0xf]
        %v230 = vld [vmem:[%s165 + $0x34] sm:$0xf]
        %v231 = vld [vmem:[%s165 + $0x38] sm:$0xf]
        %v232 = vld [vmem:[%s165 + $0x3c] sm:$0xf]
        %v233 = vunpack.c.l.bf16 %v217
        %v234 = vunpack.c.l.bf16 %v218
        %v235 = vunpack.c.l.bf16 %v219
        %v236 = vunpack.c.l.bf16 %v220
        %v237 = vunpack.c.l.bf16 %v221
        %v238 = vunpack.c.l.bf16 %v222
        %v239 = vunpack.c.l.bf16 %v223
        %v240 = vunpack.c.l.bf16 %v224
        %v241 = vunpack.c.l.bf16 %v225
        %v242 = vunpack.c.l.bf16 %v226
        %v243 = vunpack.c.l.bf16 %v227
        %v244 = vunpack.c.l.bf16 %v228
        %v245 = vunpack.c.l.bf16 %v229
        %v246 = vunpack.c.l.bf16 %v230
        %v247 = vunpack.c.l.bf16 %v231
        %v248 = vunpack.c.l.bf16 %v232
        %v249 = vld [vmem:[%s183] sm:$0x1]
        %v250 = vadd.f32 %v233, %v234
        %v251 = vadd.f32 %v250, %v235
        %v252 = vadd.f32 %v251, %v236
        %v253 = vadd.f32 %v252, %v237
        %v254 = vadd.f32 %v253, %v238
        %v255 = vadd.f32 %v254, %v239
        %v256 = vadd.f32 %v255, %v240
        %v257 = vadd.f32 %v256, %v241
        %v258 = vadd.f32 %v257, %v242
        %v259 = vadd.f32 %v258, %v243
        %v260 = vadd.f32 %v259, %v244
        %v261 = vadd.f32 %v260, %v245
        %v262 = vadd.f32 %v261, %v246
        %v263 = vadd.f32 %v262, %v247
        %v264 = vadd.f32 %v263, %v248
        %v265 = vrot.slane %v264, 4
        %v266 = vadd.f32 %v264, %v265
        %v267 = vrot.slane %v266, 2
        %v268 = vadd.f32 %v266, %v267
        %v269 = vrot.slane %v268, 1
        %v270 = vadd.f32 %v268, %v269
        %v271 = vadd.f32 %v249, %v270
        %272 = vst [vmem:[%s183] sm:$0x1] %v271
        %v273 = vld [vmem:[%s190] sm:$0xff]
        %v274 = vld [vmem:[%s190 + $0x8] sm:$0xff]
        %v275 = vld [vmem:[%s190 + $0x10] sm:$0xff]
        %v276 = vld [vmem:[%s190 + $0x18] sm:$0xff]
        %v277 = vld [vmem:[%s190 + $0x20] sm:$0xff]
        %v278 = vld [vmem:[%s190 + $0x28] sm:$0xff]
        %v279 = vld [vmem:[%s190 + $0x30] sm:$0xff]
        %v280 = vld [vmem:[%s190 + $0x38] sm:$0xff]
        %v281 = vld [vmem:[%s190 + $0x40] sm:$0xff]
        %v282 = vld [vmem:[%s190 + $0x48] sm:$0xff]
        %v283 = vld [vmem:[%s190 + $0x50] sm:$0xff]
        %v284 = vld [vmem:[%s190 + $0x58] sm:$0xff]
        %v285 = vld [vmem:[%s190 + $0x60] sm:$0xff]
        %v286 = vld [vmem:[%s190 + $0x68] sm:$0xff]
        %v287 = vld [vmem:[%s190 + $0x70] sm:$0xff]
        %v288 = vld [vmem:[%s190 + $0x78] sm:$0xff]
        %v305 = vunpack.c.l.b16 %v217
        %v306 = vunpack.c.l.b16 %v218
        %v307 = vunpack.c.l.b16 %v219
        %v308 = vunpack.c.l.b16 %v220
        %v309 = vunpack.c.l.b16 %v221
        %v310 = vunpack.c.l.b16 %v222
        %v311 = vunpack.c.l.b16 %v223
        %v312 = vunpack.c.l.b16 %v224
        %v313 = vunpack.c.l.b16 %v225
        %v314 = vunpack.c.l.b16 %v226
        %v315 = vunpack.c.l.b16 %v227
        %v316 = vunpack.c.l.b16 %v228
        %v317 = vunpack.c.l.b16 %v229
        %v318 = vunpack.c.l.b16 %v230
        %v319 = vunpack.c.l.b16 %v231
        %v320 = vunpack.c.l.b16 %v232
        %v321 = vpack.c.b16 %v306, %v305
        %v322 = vpack.c.b16 %v308, %v307
        %v323 = vpack.c.b16 %v310, %v309
        %v324 = vpack.c.b16 %v312, %v311
        %v325 = vpack.c.b16 %v314, %v313
        %v326 = vpack.c.b16 %v316, %v315
        %v327 = vpack.c.b16 %v318, %v317
        %v328 = vpack.c.b16 %v320, %v319
        %337 = vxpose.xlu0.c.b16.start [1/8] %v321, 128
        %338 = vxpose.xlu0.c.b16.cont [2/8] %v322, 128
        %339 = vxpose.xlu0.c.b16.cont [3/8] %v323, 128
        %340 = vxpose.xlu0.c.b16.cont [4/8] %v324, 128
        %341 = vxpose.xlu0.c.b16.cont [5/8] %v325, 128
        %342 = vxpose.xlu0.c.b16.cont [6/8] %v326, 128
        %343 = vxpose.xlu0.c.b16.cont [7/8] %v327, 128
        %344 = vxpose.xlu0.c.b16.end [8/8] %v328, 128
        %v345 = vpop.trf.xlu0
        %v346 = vpop.trf.xlu0
        %v347 = vpop.trf.xlu0
        %v348 = vpop.trf.xlu0
        %v349 = vpop.trf.xlu0
        %v350 = vpop.trf.xlu0
        %v351 = vpop.trf.xlu0
        %v352 = vpop.trf.xlu0
        %353 = vmatprep.subr.bf16.mxu0 0
        %354 = vmatpush1.bf16.msra.mxu0 %v321
        %355 = vmatprep.subr.bf16.mxu0 0
        %356 = vmatpush1.bf16.msra.mxu0 %v322
        %357 = vmatprep.subr.bf16.mxu0 0
        %358 = vmatpush1.bf16.msra.mxu0 %v323
        %359 = vmatprep.subr.bf16.mxu0 0
        %360 = vmatpush1.bf16.msra.mxu0 %v324
        %361 = vmatprep.subr.bf16.mxu0 0
        %362 = vmatpush1.bf16.msra.mxu0 %v325
        %363 = vmatprep.subr.bf16.mxu0 0
        %364 = vmatpush1.bf16.msra.mxu0 %v326
        %365 = vmatprep.subr.bf16.mxu0 0
        %366 = vmatpush1.bf16.msra.mxu0 %v327
        %367 = vmatprep.subr.bf16.mxu0 0
        %368 = vmatpush1.bf16.msra.mxu0 %v328
        %369 = vmatprep.subr.bf16.mxu0 0
        %370 = vmatpush1.bf16.msra.mxu0 0
        %371 = vmatprep.subr.bf16.mxu0 0
        %372 = vmatpush1.bf16.msra.mxu0 0
        %373 = vmatprep.subr.bf16.mxu0 0
        %374 = vmatpush1.bf16.msra.mxu0 0
        %375 = vmatprep.subr.bf16.mxu0 0
        %376 = vmatpush1.bf16.msra.mxu0 0
        %377 = vmatprep.subr.bf16.mxu0 0
        %378 = vmatpush1.bf16.msra.mxu0 0
        %379 = vmatprep.subr.bf16.mxu0 0
        %380 = vmatpush1.bf16.msra.mxu0 0
        %381 = vmatprep.subr.bf16.mxu0 0
        %382 = vmatpush1.bf16.msra.mxu0 0
        %383 = vmatprep.subr.bf16.mxu0 0
        %384 = vmatpush1.bf16.msra.mxu0 0
        %385 = vmatprep.mubr.bf16.mxu0 0
        %386 = vmatmul.mubr.bf16.gmra.mrb[0].mxu0 %v345
        %v387 = vpop.f32.mrb[0].mxu0
        %v388 = vadd.f32 0.0, %v387
        %v389 = vpop.f32.mrb[0].mxu0
        %v390 = vpop.f32.mrb[0].mxu0
        %v391 = vadd.f32 0.0, %v390
        %v392 = vpop.f32.mrb[0].mxu0
        %393 = vmatprep.mubr.bf16.mxu0 0
        %394 = vmatmul.mubr.bf16.gmra.mrb[0].mxu0 %v346
        %v395 = vpop.f32.mrb[0].mxu0
        %v396 = vadd.f32 0.0, %v395
        %v397 = vpop.f32.mrb[0].mxu0
        %v398 = vpop.f32.mrb[0].mxu0
        %v399 = vadd.f32 0.0, %v398
        %v400 = vpop.f32.mrb[0].mxu0
        %401 = vmatprep.mubr.bf16.mxu0 0
        %402 = vmatmul.mubr.bf16.gmra.mrb[0].mxu0 %v347
        %v403 = vpop.f32.mrb[0].mxu0
        %v404 = vadd.f32 0.0, %v403
        %v405 = vpop.f32.mrb[0].mxu0
        %v406 = vpop.f32.mrb[0].mxu0
        %v407 = vadd.f32 0.0, %v406
        %v408 = vpop.f32.mrb[0].mxu0
        %409 = vmatprep.mubr.bf16.mxu0 0
        %410 = vmatmul.mubr.bf16.gmra.mrb[0].mxu0 %v348
        %v411 = vpop.f32.mrb[0].mxu0
        %v412 = vadd.f32 0.0, %v411
        %v413 = vpop.f32.mrb[0].mxu0
        %v414 = vpop.f32.mrb[0].mxu0
        %v415 = vadd.f32 0.0, %v414
        %v416 = vpop.f32.mrb[0].mxu0
        %417 = vmatprep.mubr.bf16.mxu0 0
        %418 = vmatmul.mubr.bf16.gmra.mrb[0].mxu0 %v349
        %v419 = vpop.f32.mrb[0].mxu0
        %v420 = vadd.f32 0.0, %v419
        %v421 = vpop.f32.mrb[0].mxu0
        %v422 = vpop.f32.mrb[0].mxu0
        %v423 = vadd.f32 0.0, %v422
        %v424 = vpop.f32.mrb[0].mxu0
        %425 = vmatprep.mubr.bf16.mxu0 0
        %426 = vmatmul.mubr.bf16.gmra.mrb[0].mxu0 %v350
        %v427 = vpop.f32.mrb[0].mxu0
        %v428 = vadd.f32 0.0, %v427
        %v429 = vpop.f32.mrb[0].mxu0
        %v430 = vpop.f32.mrb[0].mxu0
        %v431 = vadd.f32 0.0, %v430
        %v432 = vpop.f32.mrb[0].mxu0
        %433 = vmatprep.mubr.bf16.mxu0 0
        %434 = vmatmul.mubr.bf16.gmra.mrb[0].mxu0 %v351
        %v435 = vpop.f32.mrb[0].mxu0
        %v436 = vadd.f32 0.0, %v435
        %v437 = vpop.f32.mrb[0].mxu0
        %v438 = vpop.f32.mrb[0].mxu0
        %v439 = vadd.f32 0.0, %v438
        %v440 = vpop.f32.mrb[0].mxu0
        %441 = vmatprep.mubr.bf16.mxu0 0
        %442 = vmatmul.mubr.bf16.gmra.mrb[0].mxu0 %v352
        %v443 = vpop.f32.mrb[0].mxu0
        %v444 = vadd.f32 0.0, %v443
        %v445 = vpop.f32.mrb[0].mxu0
        %v446 = vpop.f32.mrb[0].mxu0
        %v447 = vadd.f32 0.0, %v446
        %v448 = vpop.f32.mrb[0].mxu0
        %449 = vdwg.mxu0
        %v450 = vadd.f32 %v273, %v388
        %v451 = vadd.f32 %v274, %v391
        %v452 = vadd.f32 %v275, %v396
        %v453 = vadd.f32 %v276, %v399
        %v454 = vadd.f32 %v277, %v404
        %v455 = vadd.f32 %v278, %v407
        %v456 = vadd.f32 %v279, %v412
        %v457 = vadd.f32 %v280, %v415
        %v458 = vadd.f32 %v281, %v420
        %v459 = vadd.f32 %v282, %v423
        %v460 = vadd.f32 %v283, %v428
        %v461 = vadd.f32 %v284, %v431
        %v462 = vadd.f32 %v285, %v436
        %v463 = vadd.f32 %v286, %v439
        %v464 = vadd.f32 %v287, %v444
        %v465 = vadd.f32 %v288, %v447
        %466 = vst [vmem:[%s190] sm:$0xff] %v450
        %467 = vst [vmem:[%s190 + $0x8] sm:$0xff] %v451
        %468 = vst [vmem:[%s190 + $0x10] sm:$0xff] %v452
        %469 = vst [vmem:[%s190 + $0x18] sm:$0xff] %v453
        %470 = vst [vmem:[%s190 + $0x20] sm:$0xff] %v454
        %471 = vst [vmem:[%s190 + $0x28] sm:$0xff] %v455
        %472 = vst [vmem:[%s190 + $0x30] sm:$0xff] %v456
        %473 = vst [vmem:[%s190 + $0x38] sm:$0xff] %v457
        %474 = vst [vmem:[%s190 + $0x40] sm:$0xff] %v458
        %475 = vst [vmem:[%s190 + $0x48] sm:$0xff] %v459
        %476 = vst [vmem:[%s190 + $0x50] sm:$0xff] %v460
        %477 = vst [vmem:[%s190 + $0x58] sm:$0xff] %v461
        %478 = vst [vmem:[%s190 + $0x60] sm:$0xff] %v462
        %479 = vst [vmem:[%s190 + $0x68] sm:$0xff] %v463
        %480 = vst [vmem:[%s190 + $0x70] sm:$0xff] %v464
        %481 = vst [vmem:[%s190 + $0x78] sm:$0xff] %v465
        %s482 = sand.u32 %s73, 1
        %s483 = scalar_lea.sflag [#allocation4], %s482
        %s484 = sand.u32 %s73, 1
        %s485 = smul.addr %s484, 8
        %s486 = scalar_lea.vmem [#allocation5], %s485
        %s487 = sand.u32 %s99, 1
        %s488 = scalar_lea.sflag [#allocation7], %s487
        %s489 = sand.u32 %s99, 1
        %s490 = smul.addr %s489, 128
        %s491 = scalar_lea.vmem [#allocation6], %s490
        // Predicated region
        $region33: #{tpu_custom_call.1} parent=23 // pred_check
          %p492 = pneg %p83
        $region34: #{tpu_custom_call.1} parent=23 // pred_check_branch
          %494 = sbr.rel (%p492) target = $region36
        $region35: #{tpu_custom_call.1} parent=23 // pred_region
          %s496 = ssub.s32 128, 128
          %497 = vsyncadd %s483, %s496
          %s498 = smul.addr %s27, 128
          %s499 = scalar_lea.hbm %s1, %s498
          %s501 = sshll.u32 %s486, 4
          %s502 = int_to_ptr.vmem [resolvable:$true] %s501
          %504 = dma.vmem_to_hbm [thread:$0]  %s502, 128, %s499, %s483
        $region36: #{tpu_custom_call.1} parent=23 // pred_fallthru
          _
        // Predicated region
        $region37: #{tpu_custom_call.1} parent=23 // pred_check
          %p505 = pneg %p109
        $region38: #{tpu_custom_call.1} parent=23 // pred_check_branch
          %507 = sbr.rel (%p505) target = $region40
        $region39: #{tpu_custom_call.1} parent=23 // pred_region
          %s508 = smul.u32 16, %s27
          %s510 = ssub.s32 2048, 2048
          %511 = vsyncadd %s488, %s510
          %s512 = smul.addr %s508, 128
          %s513 = scalar_lea.hbm %s2, %s512
          %s514 = sshll.u32 %s491, 4
          %s515 = int_to_ptr.vmem [resolvable:$true] %s514
          %520 = dma.vmem_to_hbm [thread:$0]  %s515, 2048, %s513, %s488, 128, 128, 8
        $region40: #{tpu_custom_call.1} parent=23 // pred_fallthru
          _
      $region24: #{tpu_custom_call.1} parent=5 // pred_fallthru
        _
      %p521 = scmp.le.s32.totalorder 2, %s18
      // Predicated region
      $region41: #{tpu_custom_call.1} parent=5 // pred_check
        %p522 = pneg %p521
      $region42: #{tpu_custom_call.1} parent=5 // pred_check_branch
        %524 = sbr.rel (%p522) target = $region44
      $region43: #{tpu_custom_call.1} parent=5 // pred_region
        %s525 = ssub.s32 %s18, 2
        // Predicated region
        $region45: #{tpu_custom_call.1} parent=43 // pred_check
          %p526 = pneg %p89
        $region46: #{tpu_custom_call.1} parent=43 // pred_check_branch
          %528 = sbr.rel (%p526) target = $region48
        $region47: #{tpu_custom_call.1} parent=43 // pred_region
          %s529 = sand.u32 %s74, 1
          %s530 = scalar_lea.sflag [#allocation4], %s529
          %s531 = sand.u32 %s74, 1
          %s532 = smul.addr %s531, 8
          %s533 = scalar_lea.vmem [#allocation5], %s532
          %534 = dma.done %s530, 128
        $region48: #{tpu_custom_call.1} parent=43 // pred_fallthru
          _
        // Predicated region
        $region49: #{tpu_custom_call.1} parent=43 // pred_check
          %p535 = pneg %p115
        $region50: #{tpu_custom_call.1} parent=43 // pred_check_branch
          %537 = sbr.rel (%p535) target = $region52
        $region51: #{tpu_custom_call.1} parent=43 // pred_region
          %s538 = sand.u32 %s100, 1
          %s539 = scalar_lea.sflag [#allocation7], %s538
          %s540 = sand.u32 %s100, 1
          %s541 = smul.addr %s540, 128
          %s542 = scalar_lea.vmem [#allocation6], %s541
          %543 = dma.done %s539, 2048
        $region52: #{tpu_custom_call.1} parent=43 // pred_fallthru
          _
      $region44: #{tpu_custom_call.1} parent=5 // pred_fallthru
        _
    $region6: #{tpu_custom_call.1} parent=1 // loop_footer
      %s22 = sadd.s32 1, %s18
    $region7: #{tpu_custom_call.1} parent=1 // loop_footer_branch
      %17 = sbr.rel target = $region3
    $region8: #{tpu_custom_call.1} parent=1 // loop_exit
      _
    %544 = vsyncpa [#allocation3], 1
    %s545 = scalar_lea.sflag [#allocation3], 1
    %546 = vsyncpa %s545, 1
    %547 = vsyncpa [#allocation4], 1
    %s548 = scalar_lea.sflag [#allocation4], 1
    %549 = vsyncpa %s548, 1
    %550 = vsyncpa [#allocation7], 1
    %s551 = scalar_lea.sflag [#allocation7], 1
    %552 = vsyncpa %s551, 1

</llo_original>
